<compile_context>
chip_gen: v7x
topology: tpu7x:2x2x1
jax: 0.10.0
libtpu: 0.0.40
codegen_flags: <defaults>
</compile_context>

<pallas_src>
import functools

import numpy as np
import jax
import jax.numpy as jnp
from jax import lax
from jax.experimental import pallas as pl
from jax.experimental.pallas import tpu as pltpu


# ----------------------------------------------------------------------------
# Host-side construction (matches torchvision _get_gaussian_kernel1d)
# ----------------------------------------------------------------------------
def _gaussian_kernel1d(kernel_size: int, sigma: float) -> np.ndarray:
    ksize_half = (kernel_size - 1) * 0.5
    x = np.linspace(-ksize_half, ksize_half, kernel_size, dtype=np.float32)
    pdf = np.exp(-0.5 * (x / np.float32(sigma)) ** 2)
    return (pdf / pdf.sum()).astype(np.float32)


def _reflect_blur_matrix(n: int, k1: np.ndarray) -> np.ndarray:
    """Banded (n, n) matrix B such that B @ x == 1D Gaussian blur of x with reflect pad."""
    K = len(k1)
    p = K // 2
    A = np.zeros((n, n), dtype=np.float32)
    for i in range(n):
        for t in range(K):
            m = i + t - p
            if m < 0:
                m = -m
            elif m >= n:
                m = 2 * (n - 1) - m
            A[i, m] += k1[t]
    return A


def _split_bf16(a) -> tuple[jax.Array, jax.Array]:
    """f32 -> (hi, lo) bf16 pair with hi + lo ~= a to ~2^-17 relative accuracy."""
    a = jnp.asarray(a, jnp.float32)
    hi = a.astype(jnp.bfloat16)
    lo = (a - hi.astype(jnp.float32)).astype(jnp.bfloat16)
    return hi, lo


# ----------------------------------------------------------------------------
# Block sizing: model padded tiles, double-buffered I/O blocks and in-kernel temps,
# and adapt the budget to the chip's physical VMEM (64 MiB vs 128 MiB).
# ----------------------------------------------------------------------------
def _pick_tb(nc: int, h: int, w: int, in_itemsize: int, out_itemsize: int,
             num_terms: int) -> tuple[int, int]:
    hp = ((h + 7) // 8) * 8            # sublane padding
    wp = ((w + 127) // 128) * 128      # lane padding (W is the lane dim)
    plane = hp * wp

    # Pallas double-buffers the input and output blocks:
    io_bytes = 2 * (in_itemsize + out_itemsize) * plane
    # In-kernel live temporaries per plane (f32 cast of x, bf16 hi/lo splits, f32
    # intermediate + its splits, f32 output, broadcast bf16 A_h hi/lo), conservative:
    tmp_f32_equiv = 7 if num_terms == 3 else 4
    per_plane = io_bytes + tmp_f32_equiv * 4 * plane

    try:
        vmem_cap = int(pltpu.get_tpu_info().vmem_capacity_bytes)
    except Exception:  # pragma: no cover - conservative fallback
        vmem_cap = 64 * 1024 * 1024
    small_vmem = vmem_cap <= 64 * 1024 * 1024          # v7x-class chips
    budget = (12 if small_vmem else 24) * 1024 * 1024  # accounted footprint target
    vmem_limit = (48 if small_vmem else 64) * 1024 * 1024

    tb = max(1, min(budget // per_plane, nc, 32))
    # Keep >= 2 grid steps whenever possible (pipelining; megacore on multi-TC chips).
    if nc > 1 and pl.cdiv(nc, tb) < 2:
        tb = pl.cdiv(nc, 2)
    return int(tb), int(vmem_limit)


# ----------------------------------------------------------------------------
# Pallas kernel: separable reflect-padded Gaussian blur of TB planes.
#   Pass 1 (horizontal): flattened 2D matmul (tb*H, W) @ A_w^T  (weights resident, big M)
#   Pass 2 (vertical):   batched matmul A_h @ T per plane
# All MXU passes are bf16 with f32 accumulation; `num_terms == 3` adds the hi/lo
# cross terms (bf16_3x) for f32 / integer inputs.
# ----------------------------------------------------------------------------
def _blur_kernel(awt_hi_ref, awt_lo_ref, ah_hi_ref, ah_lo_ref, x_ref, o_ref,
                 *, num_terms, out_is_int, out_lo, out_hi):
    tb, h, w = x_ref.shape
    f32 = jnp.float32

    # Load + cast the block exactly once.
    x = x_ref[...].astype(f32)                               # (tb, h, w)
    x_hi = x.astype(jnp.bfloat16)
    x2_hi = x_hi.reshape(tb * h, w)

    # ---- Pass 1: horizontal blur, flattened 2D matmul ----
    awt_hi = awt_hi_ref[...]                                 # (w, w) bf16
    t = jnp.dot(x2_hi, awt_hi, preferred_element_type=f32)
    if num_terms == 3:
        x2_lo = (x - x_hi.astype(f32)).astype(jnp.bfloat16).reshape(tb * h, w)
        awt_lo = awt_lo_ref[...]
        t = t + jnp.dot(x2_lo, awt_hi, preferred_element_type=f32)
        t = t + jnp.dot(x2_hi, awt_lo, preferred_element_type=f32)
    t = t.reshape(tb, h, w)

    # ---- Pass 2: vertical blur, batched matmul over the tb planes ----
    dn = (((2,), (1,)), ((0,), (0,)))                        # contract "r", batch over planes
    t_hi = t.astype(jnp.bfloat16)
    ah_hi = jnp.broadcast_to(ah_hi_ref[...], (tb, h, h))     # bf16 (half the bytes of f32)
    o = lax.dot_general(ah_hi, t_hi, dn, preferred_element_type=f32)
    if num_terms == 3:
        t_lo = (t - t_hi.astype(f32)).astype(jnp.bfloat16)
        ah_lo = jnp.broadcast_to(ah_lo_ref[...], (tb, h, h))
        o = o + lax.dot_general(ah_hi, t_lo, dn, preferred_element_type=f32)
        o = o + lax.dot_general(ah_lo, t_hi, dn, preferred_element_type=f32)

    if out_is_int:
        o = jnp.clip(jnp.round(o), out_lo, out_hi)           # rounded cast-back, not truncation
    o_ref[...] = o.astype(o_ref.dtype)


def gaussian_blur_pallas(img: jax.Array, kernel_size: int, sigma: float) -> jax.Array:
    """img: (N, C, H, W). Returns blurred image of identical shape/dtype."""
    if kernel_size < 1 or kernel_size % 2 != 1:
        raise ValueError("kernel_size must be a positive odd integer.")
    N, C, H, W = img.shape
    pad = kernel_size // 2
    if pad >= H or pad >= W:
        raise ValueError("kernel_size//2 must be smaller than spatial dims (reflect pad).")

    k1 = _gaussian_kernel1d(kernel_size, float(sigma))
    ah = _reflect_blur_matrix(H, k1)          # (H, H)
    awt = _reflect_blur_matrix(W, k1).T       # (W, W) == A_w^T
    awt_hi, awt_lo = _split_bf16(awt)
    ah_hi, ah_lo = _split_bf16(ah)

    dt = img.dtype
    single_pass_ok = (dt == jnp.bfloat16) or (dt == jnp.float16)
    num_terms = 1 if single_pass_ok else 3
    out_is_int = bool(jnp.issubdtype(dt, jnp.integer))
    if out_is_int:
        info = jnp.iinfo(dt)
        out_lo, out_hi = float(info.min), float(info.max)
    else:
        out_lo, out_hi = 0.0, 0.0

    nc = N * C
    x = img.reshape(nc, H, W)
    itemsize = jnp.dtype(dt).itemsize
    tb, vmem_limit = _pick_tb(nc, H, W, itemsize, itemsize, num_terms)
    grid = pl.cdiv(nc, tb)   # partial trailing block handled by Pallas OOB masking

    kernel = functools.partial(
        _blur_kernel, num_terms=num_terms, out_is_int=out_is_int,
        out_lo=out_lo, out_hi=out_hi)

    out = pl.pallas_call(
        kernel,
        out_shape=jax.ShapeDtypeStruct((nc, H, W), dt),
        grid=(grid,),
        in_specs=[
            pl.BlockSpec((W, W), lambda i: (0, 0)),           # A_w^T hi
            pl.BlockSpec((W, W), lambda i: (0, 0)),           # A_w^T lo
            pl.BlockSpec((H, H), lambda i: (0, 0)),           # A_h   hi
            pl.BlockSpec((H, H), lambda i: (0, 0)),           # A_h   lo
            pl.BlockSpec((tb, H, W), lambda i: (i, 0, 0)),    # tb planes per step
        ],
        out_specs=pl.BlockSpec((tb, H, W), lambda i: (i, 0, 0)),
        compiler_params=pltpu.CompilerParams(
            dimension_semantics=("parallel",),
            vmem_limit_bytes=vmem_limit,
        ),
    )(awt_hi, awt_lo, ah_hi, ah_lo, x)

    return out.reshape(N, C, H, W)


class Blur:
    """JAX/Pallas port of the PyTorch Blur module (eval-mode forward)."""

    def __init__(self, kernel_size: int, sigma_min: float, sigma_max: float):
        self.kernel_size = kernel_size
        self.sigma_min = sigma_min
        self.sigma_max = sigma_max
        self.sigma_avg = (sigma_min + sigma_max) / 2

    def __call__(self, img, _=None):
        return gaussian_blur_pallas(img, self.kernel_size, self.sigma_avg)


if __name__ == "__main__":
    key = jax.random.PRNGKey(0)
    N, C, H, W = 2, 4, 16, 16
    x = jax.random.normal(key, (N, C, H, W), dtype=jnp.float32)

    blur = Blur(kernel_size=5, sigma_min=0.1, sigma_max=2.0)
    y = blur(x)
    y = jax.block_until_ready(y)

    # Reference check (numpy, same math as torchvision gaussian_blur in eval mode:
    # reflect pad + K x K Gaussian taps).
    K = 5
    k1 = _gaussian_kernel1d(K, blur.sigma_avg)
    kern2d = np.outer(k1, k1).astype(np.float32)
    pad = K // 2
    xnp = np.asarray(x).reshape(N * C, H, W)
    xpad = np.pad(xnp, ((0, 0), (pad, pad), (pad, pad)), mode="reflect")
    ref = np.zeros((N * C, H, W), np.float32)
    for ki in range(K):
        for kj in range(K):
            ref += kern2d[ki, kj] * xpad[:, ki:ki + H, kj:kj + W]
    ref = ref.reshape(N, C, H, W)
    np.testing.assert_allclose(np.asarray(y), ref, rtol=1e-4, atol=1e-4)

    print("KERNEL_OK")
</pallas_src>

<mosaic_0001>
module attributes {stable_mosaic.version = 11 : i64} {
  func.func @_blur_kernel(%arg0: i32, %arg1: memref<16x16xbf16, #tpu.memory_space<vmem>>, %arg2: memref<16x16xbf16, #tpu.memory_space<vmem>>, %arg3: memref<16x16xbf16, #tpu.memory_space<vmem>>, %arg4: memref<16x16xbf16, #tpu.memory_space<vmem>>, %arg5: memref<4x16x16xf32, #tpu.memory_space<vmem>>, %arg6: memref<4x16x16xf32, #tpu.memory_space<vmem>>) attributes {dimension_semantics = [#tpu.dimension_semantics<parallel>], iteration_bounds = array<i64: 2>, scalar_prefetch = 0 : i64, scratch_operands = 0 : i64, tpu.core_type = #tpu.core_type<tc>, window_params = [{pipeline_mode = #tpu.pipeline_mode<synchronous>, transform_indices = @transform_0, window_bounds = array<i64: 16, 16>}, {pipeline_mode = #tpu.pipeline_mode<synchronous>, transform_indices = @transform_1, window_bounds = array<i64: 16, 16>}, {pipeline_mode = #tpu.pipeline_mode<synchronous>, transform_indices = @transform_2, window_bounds = array<i64: 16, 16>}, {pipeline_mode = #tpu.pipeline_mode<synchronous>, transform_indices = @transform_3, window_bounds = array<i64: 16, 16>}, {transform_indices = @transform_4, window_bounds = array<i64: 4, 16, 16>}, {transform_indices = @transform_5, window_bounds = array<i64: 4, 16, 16>}]} {
    %c0 = arith.constant 0 : index
    %c0_0 = arith.constant 0 : index
    %c0_1 = arith.constant 0 : index
    %0 = vector.load %arg5[%c0, %c0_0, %c0_1] : memref<4x16x16xf32, #tpu.memory_space<vmem>>, vector<4x16x16xf32>
    %1 = arith.truncf %0 : vector<4x16x16xf32> to vector<4x16x16xbf16>
    %2 = vector.shape_cast %1 : vector<4x16x16xbf16> to vector<64x16xbf16>
    %c0_2 = arith.constant 0 : index
    %c0_3 = arith.constant 0 : index
    %3 = vector.load %arg1[%c0_2, %c0_3] : memref<16x16xbf16, #tpu.memory_space<vmem>>, vector<16x16xbf16>
    %cst = arith.constant dense<0.000000e+00> : vector<64x16xf32>
    %4 = tpu.matmul %2, %3, %cst {dimension_numbers = #tpu.dot_dimension_numbers<[1], [0], [0], [1], [0, 0, 1, 1], [], []>} : vector<64x16xbf16>, vector<16x16xbf16>, vector<64x16xf32> -> vector<64x16xf32>
    %5 = arith.extf %1 : vector<4x16x16xbf16> to vector<4x16x16xf32>
    %6 = arith.subf %0, %5 : vector<4x16x16xf32>
    %7 = arith.truncf %6 : vector<4x16x16xf32> to vector<4x16x16xbf16>
    %8 = vector.shape_cast %7 : vector<4x16x16xbf16> to vector<64x16xbf16>
    %c0_4 = arith.constant 0 : index
    %c0_5 = arith.constant 0 : index
    %9 = vector.load %arg2[%c0_4, %c0_5] : memref<16x16xbf16, #tpu.memory_space<vmem>>, vector<16x16xbf16>
    %cst_6 = arith.constant dense<0.000000e+00> : vector<64x16xf32>
    %10 = tpu.matmul %8, %3, %cst_6 {dimension_numbers = #tpu.dot_dimension_numbers<[1], [0], [0], [1], [0, 0, 1, 1], [], []>} : vector<64x16xbf16>, vector<16x16xbf16>, vector<64x16xf32> -> vector<64x16xf32>
    %11 = arith.addf %4, %10 : vector<64x16xf32>
    %cst_7 = arith.constant dense<0.000000e+00> : vector<64x16xf32>
    %12 = tpu.matmul %2, %9, %cst_7 {dimension_numbers = #tpu.dot_dimension_numbers<[1], [0], [0], [1], [0, 0, 1, 1], [], []>} : vector<64x16xbf16>, vector<16x16xbf16>, vector<64x16xf32> -> vector<64x16xf32>
    %13 = arith.addf %11, %12 : vector<64x16xf32>
    %14 = vector.shape_cast %13 : vector<64x16xf32> to vector<4x16x16xf32>
    %15 = arith.truncf %14 : vector<4x16x16xf32> to vector<4x16x16xbf16>
    %c0_8 = arith.constant 0 : index
    %c0_9 = arith.constant 0 : index
    %16 = vector.load %arg3[%c0_8, %c0_9] : memref<16x16xbf16, #tpu.memory_space<vmem>>, vector<16x16xbf16>
    %17 = vector.shape_cast %16 : vector<16x16xbf16> to vector<1x16x16xbf16>
    %18 = vector.broadcast %17 : vector<1x16x16xbf16> to vector<4x16x16xbf16>
    %cst_10 = arith.constant dense<0.000000e+00> : vector<4x16x16xf32>
    %19 = tpu.matmul %18, %15, %cst_10 {dimension_numbers = #tpu.dot_dimension_numbers<[2], [1], [1], [2], [0, 0, 0, 1, 1, 2], [0], [0]>} : vector<4x16x16xbf16>, vector<4x16x16xbf16>, vector<4x16x16xf32> -> vector<4x16x16xf32>
    %20 = arith.extf %15 : vector<4x16x16xbf16> to vector<4x16x16xf32>
    %21 = arith.subf %14, %20 : vector<4x16x16xf32>
    %22 = arith.truncf %21 : vector<4x16x16xf32> to vector<4x16x16xbf16>
    %c0_11 = arith.constant 0 : index
    %c0_12 = arith.constant 0 : index
    %23 = vector.load %arg4[%c0_11, %c0_12] : memref<16x16xbf16, #tpu.memory_space<vmem>>, vector<16x16xbf16>
    %24 = vector.shape_cast %23 : vector<16x16xbf16> to vector<1x16x16xbf16>
    %25 = vector.broadcast %24 : vector<1x16x16xbf16> to vector<4x16x16xbf16>
    %cst_13 = arith.constant dense<0.000000e+00> : vector<4x16x16xf32>
    %26 = tpu.matmul %18, %22, %cst_13 {dimension_numbers = #tpu.dot_dimension_numbers<[2], [1], [1], [2], [0, 0, 0, 1, 1, 2], [0], [0]>} : vector<4x16x16xbf16>, vector<4x16x16xbf16>, vector<4x16x16xf32> -> vector<4x16x16xf32>
    %27 = arith.addf %19, %26 : vector<4x16x16xf32>
    %cst_14 = arith.constant dense<0.000000e+00> : vector<4x16x16xf32>
    %28 = tpu.matmul %25, %15, %cst_14 {dimension_numbers = #tpu.dot_dimension_numbers<[2], [1], [1], [2], [0, 0, 0, 1, 1, 2], [0], [0]>} : vector<4x16x16xbf16>, vector<4x16x16xbf16>, vector<4x16x16xf32> -> vector<4x16x16xf32>
    %29 = arith.addf %27, %28 : vector<4x16x16xf32>
    %c0_15 = arith.constant 0 : index
    %c0_16 = arith.constant 0 : index
    %c0_17 = arith.constant 0 : index
    %30 = vector.load %arg6[%c0_15, %c0_16, %c0_17] : memref<4x16x16xf32, #tpu.memory_space<vmem>>, vector<4x16x16xf32>
    tpu.vector_store %arg6[%c0_15, %c0_16, %c0_17], %29 {strides = array<i32>} : memref<4x16x16xf32, #tpu.memory_space<vmem>>, vector<4x16x16xf32>,
    return
  }
  func.func @transform_0(%arg0: i32) -> (i32, i32) {
    %c0_i32 = arith.constant 0 : i32
    %c0_i32_0 = arith.constant 0 : i32
    %c0_i32_1 = arith.constant 0 : i32
    return %c0_i32, %c0_i32_0 : i32, i32
  }
  func.func @transform_1(%arg0: i32) -> (i32, i32) {
    %c0_i32 = arith.constant 0 : i32
    %c0_i32_0 = arith.constant 0 : i32
    %c0_i32_1 = arith.constant 0 : i32
    return %c0_i32, %c0_i32_0 : i32, i32
  }
  func.func @transform_2(%arg0: i32) -> (i32, i32) {
    %c0_i32 = arith.constant 0 : i32
    %c0_i32_0 = arith.constant 0 : i32
    %c0_i32_1 = arith.constant 0 : i32
    return %c0_i32, %c0_i32_0 : i32, i32
  }
  func.func @transform_3(%arg0: i32) -> (i32, i32) {
    %c0_i32 = arith.constant 0 : i32
    %c0_i32_0 = arith.constant 0 : i32
    %c0_i32_1 = arith.constant 0 : i32
    return %c0_i32, %c0_i32_0 : i32, i32
  }
  func.func @transform_4(%arg0: i32) -> (i32, i32, i32) {
    %c0_i32 = arith.constant 0 : i32
    %c0_i32_0 = arith.constant 0 : i32
    %c0_i32_1 = arith.constant 0 : i32
    return %arg0, %c0_i32, %c0_i32_0 : i32, i32, i32
  }
  func.func @transform_5(%arg0: i32) -> (i32, i32, i32) {
    %c0_i32 = arith.constant 0 : i32
    %c0_i32_0 = arith.constant 0 : i32
    %c0_i32_1 = arith.constant 0 : i32
    return %arg0, %c0_i32, %c0_i32_0 : i32, i32, i32
  }
}

</mosaic_0001>

<llo_original>
// kernel: tpu_custom_call.1
$region0: #{tpu_custom_call.1}
  #allocation0 [shape = 'u32[]', space=smem, size = 0x4, offset = 0x4, fixed_abs, tag = 'smem constant byte address 0x4 - core index']
  #allocation1 [shape = 'u32[144,128]{1,0:T(1,128)}', space=vmem, size = 0x12000, scoped, tag = 'internal scratch']
  %s0 = inlined_call_operand.hbm [shape: bf16[16,16], index: 0, kind: input, shape index: {}]
  %s1 = inlined_call_operand.hbm [shape: bf16[16,16], index: 1, kind: input, shape index: {}]
  %s2 = inlined_call_operand.hbm [shape: bf16[16,16], index: 2, kind: input, shape index: {}]
  %s3 = inlined_call_operand.vmem [shape: bf16[16,16], index: 3, kind: input, shape index: {}]
  %s4 = inlined_call_operand.hbm [shape: f32[8,16,16], index: 4, kind: input, shape index: {}]
  %s5 = inlined_call_operand.hbm [shape: f32[8,16,16], index: 5, kind: output, shape index: {}]
  %s6 = sld [smem:[#allocation0]]
  $region69: #{tpu_custom_call.1} parent=0
    _
  %s8 = ssub.s32 1, %s6
  %s9 = scalar_select 0, %s8, %s6
  $region1: #{tpu_custom_call.1} parent=0
    #allocation2 [shape = 'u8[4096]{0}', space=vmem, size = 0x1000, scoped, tag = 'input window, operand 0, single buffered']
    #allocation3 [shape = 's32[2]{0}', space=sflag, size = 0x8, scoped, tag = 'scoped memory for tpu_custom_call.1']
    #allocation4 [shape = 's32[2]{0}', space=sflag, size = 0x8, scoped, tag = 'scoped memory for tpu_custom_call.1']
    #allocation5 [shape = 'u8[4096]{0}', space=vmem, size = 0x1000, scoped, tag = 'input window, operand 1, single buffered']
    #allocation6 [shape = 's32[1]{0}', space=sflag, size = 0x4, scoped, tag = 'scoped memory for tpu_custom_call.1']
    #allocation7 [shape = 'u8[4096]{0}', space=vmem, size = 0x1000, scoped, tag = 'input window, operand 2, single buffered']
    #allocation8 [shape = 'u8[65536]{0}', space=vmem, size = 0x10000, scoped, tag = 'input window, operand 4']
    #allocation9 [shape = 's32[2]{0}', space=sflag, size = 0x8, scoped, tag = 'scoped memory for tpu_custom_call.1']
    #allocation10 [shape = 'u8[65536]{0}', space=vmem, size = 0x10000, scoped, tag = 'output window, operand 0']
    %10 = vsyncpa [#allocation3], 0
    %11 = vsyncpa [#allocation6], 0
    %12 = vsyncpa [#allocation9], 0
    %s13 = scalar_lea.sflag [#allocation9], 1
    %14 = vsyncpa %s13, 0
    %15 = vsyncpa [#allocation4], 0
    %s16 = scalar_lea.sflag [#allocation4], 1
    %17 = vsyncpa %s16, 0
    loop: start=0, step=1, limit=4
    $region2: #{tpu_custom_call.1} parent=1 // loop_pre_header
      _
    $region3: #{tpu_custom_call.1} parent=1 // loop_header
      %s19 = sphi 0, %s23
      %p20 = scmp.ge.s32.totalorder %s19, 4
      %s27 = sphi 0, %s27
      %s29 = sphi 0, %s27
      %s30 = sphi 0, %s29
      %s44 = sphi 0, %s30
      %s48 = sphi 0, %s48
      %s50 = sphi 0, %s48
      %s51 = sphi 0, %s50
      %s65 = sphi 0, %s51
      %s69 = sphi 0, %s69
      %s71 = sphi 0, %s69
      %s72 = sphi 0, %s71
      %s86 = sphi 0, %s72
      %s90 = sphi 0, %s90
      %s92 = sphi 0, %s90
      %s93 = sphi 0, %s92
      %s107 = sphi 0, %s93
      %s113 = sphi 0, %s115
      %s116 = sphi 0, %s113
      %s117 = sphi 0, %s116
      %s133 = sphi 0, %s117
      %s139 = sphi 0, %s141
      %s142 = sphi 0, %s139
      %s143 = sphi 0, %s142
      %s159 = sphi 0, %s143
    $region4: #{tpu_custom_call.1} parent=1 // loop_header_branch
      %22 = sbr.rel (%p20) target = $region8
    $region5: #{tpu_custom_call.1} parent=1 // loop_body
      %s24 = ssub.s32 %s19, 1
      %s25 = ssub.s32 %s19, 2
      %s26 = sadd.s32 %s19, 1
      %s28 = sadd.s32 %s27, 1
      %p31 = scmp.eq.s32.totalorder %s19, 1
      %p32 = scmp.ne.s32.totalorder %s27, %s29
      %p33 = scmp.eq.s32.totalorder %s19, 0
      %p34 = por %p32, %p33
      %p35 = scmp.ne.s32.totalorder %s27, %s29
      %p36 = scmp.eq.s32.totalorder %s24, 1
      %p37 = por %p35, %p36
      %p38 = scmp.ne.s32.totalorder %s29, %s30
      %p39 = scmp.eq.s32.totalorder %s24, 0
      %p40 = por %p38, %p39
      %p41 = scmp.ne.s32.totalorder %s29, %s30
      %p42 = scmp.eq.s32.totalorder %s25, 1
      %p43 = por %p41, %p42
      %p45 = scmp.ne.s32.totalorder %s30, %s44
      %p46 = scmp.eq.s32.totalorder %s25, 0
      %p47 = por %p45, %p46
      %s49 = sadd.s32 %s48, 1
      %p52 = scmp.eq.s32.totalorder %s19, 1
      %p53 = scmp.ne.s32.totalorder %s48, %s50
      %p54 = scmp.eq.s32.totalorder %s19, 0
      %p55 = por %p53, %p54
      %p56 = scmp.ne.s32.totalorder %s48, %s50
      %p57 = scmp.eq.s32.totalorder %s24, 1
      %p58 = por %p56, %p57
      %p59 = scmp.ne.s32.totalorder %s50, %s51
      %p60 = scmp.eq.s32.totalorder %s24, 0
      %p61 = por %p59, %p60
      %p62 = scmp.ne.s32.totalorder %s50, %s51
      %p63 = scmp.eq.s32.totalorder %s25, 1
      %p64 = por %p62, %p63
      %p66 = scmp.ne.s32.totalorder %s51, %s65
      %p67 = scmp.eq.s32.totalorder %s25, 0
      %p68 = por %p66, %p67
      %s70 = sadd.s32 %s69, 1
      %p73 = scmp.eq.s32.totalorder %s19, 1
      %p74 = scmp.ne.s32.totalorder %s69, %s71
      %p75 = scmp.eq.s32.totalorder %s19, 0
      %p76 = por %p74, %p75
      %p77 = scmp.ne.s32.totalorder %s69, %s71
      %p78 = scmp.eq.s32.totalorder %s24, 1
      %p79 = por %p77, %p78
      %p80 = scmp.ne.s32.totalorder %s71, %s72
      %p81 = scmp.eq.s32.totalorder %s24, 0
      %p82 = por %p80, %p81
      %p83 = scmp.ne.s32.totalorder %s71, %s72
      %p84 = scmp.eq.s32.totalorder %s25, 1
      %p85 = por %p83, %p84
      %p87 = scmp.ne.s32.totalorder %s72, %s86
      %p88 = scmp.eq.s32.totalorder %s25, 0
      %p89 = por %p87, %p88
      %s91 = sadd.s32 %s90, 1
      %p94 = scmp.eq.s32.totalorder %s19, 1
      %p95 = scmp.ne.s32.totalorder %s90, %s92
      %p96 = scmp.eq.s32.totalorder %s19, 0
      %p97 = por %p95, %p96
      %p98 = scmp.ne.s32.totalorder %s90, %s92
      %p99 = scmp.eq.s32.totalorder %s24, 1
      %p100 = por %p98, %p99
      %p101 = scmp.ne.s32.totalorder %s92, %s93
      %p102 = scmp.eq.s32.totalorder %s24, 0
      %p103 = por %p101, %p102
      %p104 = scmp.ne.s32.totalorder %s92, %s93
      %p105 = scmp.eq.s32.totalorder %s25, 1
      %p106 = por %p104, %p105
      %p108 = scmp.ne.s32.totalorder %s93, %s107
      %p109 = scmp.eq.s32.totalorder %s25, 0
      %p110 = por %p108, %p109
      %s111 = ssub.s32 %s19, %s26
      %p112 = scmp.eq.s32.totalorder %s111, 0
      %s114 = sadd.s32 %s113, 1
      %s115 = scalar_select %p112, %s113, %s114
      %p118 = pneg %p112
      %p119 = scmp.eq.s32.totalorder %s19, 1
      %p120 = por %p118, %p119
      %p121 = scmp.ne.s32.totalorder %s113, %s116
      %p122 = scmp.eq.s32.totalorder %s19, 0
      %p123 = por %p121, %p122
      %p124 = scmp.ne.s32.totalorder %s113, %s116
      %p125 = scmp.eq.s32.totalorder %s24, 1
      %p126 = por %p124, %p125
      %p127 = scmp.ne.s32.totalorder %s116, %s117
      %p128 = scmp.eq.s32.totalorder %s24, 0
      %p129 = por %p127, %p128
      %p130 = scmp.ne.s32.totalorder %s116, %s117
      %p131 = scmp.eq.s32.totalorder %s25, 1
      %p132 = por %p130, %p131
      %p134 = scmp.ne.s32.totalorder %s117, %s133
      %p135 = scmp.eq.s32.totalorder %s25, 0
      %p136 = por %p134, %p135
      %s137 = ssub.s32 %s19, %s26
      %p138 = scmp.eq.s32.totalorder %s137, 0
      %s140 = sadd.s32 %s139, 1
      %s141 = scalar_select %p138, %s139, %s140
      %p144 = pneg %p138
      %p145 = scmp.eq.s32.totalorder %s19, 1
      %p146 = por %p144, %p145
      %p147 = scmp.ne.s32.totalorder %s139, %s142
      %p148 = scmp.eq.s32.totalorder %s19, 0
      %p149 = por %p147, %p148
      %p150 = scmp.ne.s32.totalorder %s139, %s142
      %p151 = scmp.eq.s32.totalorder %s24, 1
      %p152 = por %p150, %p151
      %p153 = scmp.ne.s32.totalorder %s142, %s143
      %p154 = scmp.eq.s32.totalorder %s24, 0
      %p155 = por %p153, %p154
      %p156 = scmp.ne.s32.totalorder %s142, %s143
      %p157 = scmp.eq.s32.totalorder %s25, 1
      %p158 = por %p156, %p157
      %p160 = scmp.ne.s32.totalorder %s143, %s159
      %p161 = scmp.eq.s32.totalorder %s25, 0
      %p162 = por %p160, %p161
      %p163 = scmp.le.s32.totalorder 1, %s19
      %p164 = scmp.lt.s32.totalorder %s19, 3
      %p165 = pnand %p163, %p164
      %p166 = pneg %p165
      // Predicated region
      $region9: #{tpu_custom_call.1} parent=5 // pred_check
        _
      $region10: #{tpu_custom_call.1} parent=5 // pred_check_branch
        %168 = sbr.rel (%p165) target = $region12
      $region11: #{tpu_custom_call.1} parent=5 // pred_region
        %s169 = ssub.s32 %s19, 1
        // Predicated region
        $region13: #{tpu_custom_call.1} parent=11 // pred_check
          %p170 = pneg %p40
        $region14: #{tpu_custom_call.1} parent=11 // pred_check_branch
          %172 = sbr.rel (%p170) target = $region16
        $region15: #{tpu_custom_call.1} parent=11 // pred_region
          %s174 = ssub.s32 128, 128
          %175 = vsyncadd [#allocation3], %s174
          %s176 = sshll.u32 [#allocation2], 4
          %s177 = int_to_ptr.vmem [resolvable:$true] %s176
          %182 = dma.hbm_to_vmem [thread:$0]  %s0, 128, %s177, [#allocation3], 64, 64, 4
        $region16: #{tpu_custom_call.1} parent=11 // pred_fallthru
          _
        // Predicated region
        $region17: #{tpu_custom_call.1} parent=11 // pred_check
          %p183 = pneg %p61
        $region18: #{tpu_custom_call.1} parent=11 // pred_check_branch
          %185 = sbr.rel (%p183) target = $region20
        $region19: #{tpu_custom_call.1} parent=11 // pred_region
          %s187 = ssub.s32 128, 128
          %188 = vsyncadd [#allocation6], %s187
          %s189 = sshll.u32 [#allocation5], 4
          %s190 = int_to_ptr.vmem [resolvable:$true] %s189
          %195 = dma.hbm_to_vmem [thread:$0]  %s1, 128, %s190, [#allocation6], 64, 64, 4
        $region20: #{tpu_custom_call.1} parent=11 // pred_fallthru
          _
        // Predicated region
        $region21: #{tpu_custom_call.1} parent=11 // pred_check
          %p196 = pneg %p82
        $region22: #{tpu_custom_call.1} parent=11 // pred_check_branch
          %198 = sbr.rel (%p196) target = $region24
        $region23: #{tpu_custom_call.1} parent=11 // pred_region
          %s200 = ssub.s32 128, 128
          %201 = vsyncadd [#allocation6], %s200
          %s202 = sshll.u32 [#allocation7], 4
          %s203 = int_to_ptr.vmem [resolvable:$true] %s202
          %208 = dma.hbm_to_vmem [thread:$0]  %s2, 128, %s203, [#allocation6], 64, 64, 4
        $region24: #{tpu_custom_call.1} parent=11 // pred_fallthru
          _
        // Predicated region
        $region25: #{tpu_custom_call.1} parent=11 // pred_check
          %p209 = pneg %p103
        $region26: #{tpu_custom_call.1} parent=11 // pred_check_branch
          %211 = sbr.rel (%p209) target = $region28
        $region27: #{tpu_custom_call.1} parent=11 // pred_region
          _
        $region28: #{tpu_custom_call.1} parent=11 // pred_fallthru
          _
      $region12: #{tpu_custom_call.1} parent=5 // pred_fallthru
        _
      %p212 = scmp.lt.s32.totalorder %s19, 2
      // Predicated region
      $region29: #{tpu_custom_call.1} parent=5 // pred_check
        %p213 = pneg %p212
      $region30: #{tpu_custom_call.1} parent=5 // pred_check_branch
        %215 = sbr.rel (%p213) target = $region32
      $region31: #{tpu_custom_call.1} parent=5 // pred_region
        // Predicated region
        $region33: #{tpu_custom_call.1} parent=31 // pred_check
          %p216 = pneg %p123
        $region34: #{tpu_custom_call.1} parent=31 // pred_check_branch
          %218 = sbr.rel (%p216) target = $region36
        $region35: #{tpu_custom_call.1} parent=31 // pred_region
          %s219 = sand.u32 %s113, 1
          %s220 = scalar_lea.sflag [#allocation9], %s219
          %s221 = sand.u32 %s113, 1
          %s222 = smul.addr %s221, 64
          %s223 = scalar_lea.vmem [#allocation8], %s222
          %s224 = smul.u32 4, %s19
          %s226 = ssub.s32 1024, 1024
          %227 = vsyncadd %s220, %s226
          %s228 = smul.addr %s224, 2
          %s229 = smul.addr %s228, 128
          %s230 = scalar_lea.hbm %s4, %s229
          %s231 = sshll.u32 %s223, 4
          %s232 = int_to_ptr.vmem [resolvable:$true] %s231
          %237 = dma.hbm_to_vmem [thread:$0]  %s230, 1024, %s232, %s220, 128, 128, 8
        $region36: #{tpu_custom_call.1} parent=31 // pred_fallthru
          _
      $region32: #{tpu_custom_call.1} parent=5 // pred_fallthru
        _
      %p238 = scmp.le.s32.totalorder 1, %s19
      %p239 = scmp.lt.s32.totalorder %s19, 3
      %p240 = pnand %p238, %p239
      %p241 = pneg %p240
      // Predicated region
      $region37: #{tpu_custom_call.1} parent=5 // pred_check
        _
      $region38: #{tpu_custom_call.1} parent=5 // pred_check_branch
        %243 = sbr.rel (%p240) target = $region40
      $region39: #{tpu_custom_call.1} parent=5 // pred_region
        %s244 = ssub.s32 %s19, 1
        // Predicated region
        $region41: #{tpu_custom_call.1} parent=39 // pred_check
          %p245 = pneg %p40
        $region42: #{tpu_custom_call.1} parent=39 // pred_check_branch
          %247 = sbr.rel (%p245) target = $region44
        $region43: #{tpu_custom_call.1} parent=39 // pred_region
          %248 = dma.done [#allocation3], 128
        $region44: #{tpu_custom_call.1} parent=39 // pred_fallthru
          _
        // Predicated region
        $region45: #{tpu_custom_call.1} parent=39 // pred_check
          %p249 = pneg %p61
        $region46: #{tpu_custom_call.1} parent=39 // pred_check_branch
          %251 = sbr.rel (%p249) target = $region48
        $region47: #{tpu_custom_call.1} parent=39 // pred_region
          %252 = dma.done [#allocation6], 128
        $region48: #{tpu_custom_call.1} parent=39 // pred_fallthru
          _
        // Predicated region
        $region49: #{tpu_custom_call.1} parent=39 // pred_check
          %p253 = pneg %p82
        $region50: #{tpu_custom_call.1} parent=39 // pred_check_branch
          %255 = sbr.rel (%p253) target = $region52
        $region51: #{tpu_custom_call.1} parent=39 // pred_region
          %256 = dma.done [#allocation6], 128
        $region52: #{tpu_custom_call.1} parent=39 // pred_fallthru
          _
        %s257 = sand.u32 %s116, 1
        %s258 = scalar_lea.sflag [#allocation9], %s257
        %s259 = sand.u32 %s116, 1
        %s260 = smul.addr %s259, 64
        %s261 = scalar_lea.vmem [#allocation8], %s260
        // Predicated region
        $region53: #{tpu_custom_call.1} parent=39 // pred_check
          %p262 = pneg %p129
        $region54: #{tpu_custom_call.1} parent=39 // pred_check_branch
          %264 = sbr.rel (%p262) target = $region56
        $region55: #{tpu_custom_call.1} parent=39 // pred_region
          %265 = dma.done %s258, 1024
        $region56: #{tpu_custom_call.1} parent=39 // pred_fallthru
          _
        %p266 = pneg %p40
        %p267 = pneg %p37
        %p268 = pneg %p61
        %p269 = pneg %p58
        %p270 = pneg %p82
        %p271 = pneg %p79
        %p272 = pneg %p103
        %p273 = pneg %p100
        %s274 = sand.u32 %s116, 1
        %s275 = scalar_lea.sflag [#allocation9], %s274
        %s276 = sand.u32 %s116, 1
        %s277 = smul.addr %s276, 64
        %s278 = scalar_lea.vmem [#allocation8], %s277
        %p279 = pneg %p129
        %p280 = pneg %p126
        %p281 = pneg %p155
        %p282 = pneg %p152
        %s283 = sand.u32 %s142, 1
        %s284 = scalar_lea.sflag [#allocation4], %s283
        %s285 = sand.u32 %s142, 1
        %s286 = smul.addr %s285, 64
        %s287 = scalar_lea.vmem [#allocation10], %s286
        %s288 = smul.u32 4, %s24
        %s289 = smul.u32 4, %s24
        %v291 = vld [vmem:[%s261] sm:$0xff]
        %v292 = vld [vmem:[%s261 + $0x8] sm:$0xff]
        %v293 = vld [vmem:[%s261 + $0x10] sm:$0xff]
        %v294 = vld [vmem:[%s261 + $0x18] sm:$0xff]
        %v295 = vld [vmem:[%s261 + $0x20] sm:$0xff]
        %v296 = vld [vmem:[%s261 + $0x28] sm:$0xff]
        %v297 = vld [vmem:[%s261 + $0x30] sm:$0xff]
        %v298 = vld [vmem:[%s261 + $0x38] sm:$0xff]
        %v299 = vpack.c.bf16 %v292, %v291
        %v300 = vpack.c.bf16 %v294, %v293
        %v301 = vpack.c.bf16 %v296, %v295
        %v302 = vpack.c.bf16 %v298, %v297
        %v303 = vld [vmem:[#allocation2] sm:$0xf]
        %v304 = vld [vmem:[#allocation2 + $0x4] sm:$0xf]
        %v305 = vunpack.c.l.bf16 %v299
        %v306 = vunpack.c.h.bf16 %v299
        %v307 = vunpack.c.l.bf16 %v300
        %v308 = vunpack.c.h.bf16 %v300
        %v309 = vunpack.c.l.bf16 %v301
        %v310 = vunpack.c.h.bf16 %v301
        %v311 = vunpack.c.l.bf16 %v302
        %v312 = vunpack.c.h.bf16 %v302
        %v313 = vsub.f32 %v291, %v305
        %v314 = vsub.f32 %v292, %v306
        %v315 = vsub.f32 %v293, %v307
        %v316 = vsub.f32 %v294, %v308
        %v317 = vsub.f32 %v295, %v309
        %v318 = vsub.f32 %v296, %v310
        %v319 = vsub.f32 %v297, %v311
        %v320 = vsub.f32 %v298, %v312
        %v321 = vpack.c.bf16 %v314, %v313
        %v322 = vpack.c.bf16 %v316, %v315
        %v323 = vpack.c.bf16 %v318, %v317
        %v324 = vpack.c.bf16 %v320, %v319
        %v325 = vld [vmem:[#allocation5] sm:$0xf]
        %v326 = vld [vmem:[#allocation5 + $0x4] sm:$0xf]
        %v329 = vunpack.c.l.b16 %v303
        %v330 = vunpack.c.l.b16 %v304
        %v331 = vpack.c.b16 %v330, %v329
        %vm333 = vcmask 130048
        %v335 = vsel %vm333, %v321, 0
        %v338 = vsel %vm333, %v322, 0
        %v341 = vsel %vm333, %v323, 0
        %v344 = vsel %vm333, %v324, 0
        %346 = vmatprep.subr.bf16.mxu0 0
        %347 = vmatpush1.bf16.msra.mxu0 %v331
        %348 = vmatprep.subr.bf16.mxu0 0
        %349 = vmatpush1.bf16.msra.mxu0 0
        %350 = vmatprep.subr.bf16.mxu0 0
        %351 = vmatpush1.bf16.msra.mxu0 0
        %352 = vmatprep.subr.bf16.mxu0 0
        %353 = vmatpush1.bf16.msra.mxu0 0
        %354 = vmatprep.subr.bf16.mxu0 0
        %355 = vmatpush1.bf16.msra.mxu0 0
        %356 = vmatprep.subr.bf16.mxu0 0
        %357 = vmatpush1.bf16.msra.mxu0 0
        %358 = vmatprep.subr.bf16.mxu0 0
        %359 = vmatpush1.bf16.msra.mxu0 0
        %360 = vmatprep.subr.bf16.mxu0 0
        %361 = vmatpush1.bf16.msra.mxu0 0
        %362 = vmatprep.subr.bf16.mxu0 0
        %363 = vmatpush1.bf16.msra.mxu0 0
        %364 = vmatprep.subr.bf16.mxu0 0
        %365 = vmatpush1.bf16.msra.mxu0 0
        %366 = vmatprep.subr.bf16.mxu0 0
        %367 = vmatpush1.bf16.msra.mxu0 0
        %368 = vmatprep.subr.bf16.mxu0 0
        %369 = vmatpush1.bf16.msra.mxu0 0
        %370 = vmatprep.subr.bf16.mxu0 0
        %371 = vmatpush1.bf16.msra.mxu0 0
        %372 = vmatprep.subr.bf16.mxu0 0
        %373 = vmatpush1.bf16.msra.mxu0 0
        %374 = vmatprep.subr.bf16.mxu0 0
        %375 = vmatpush1.bf16.msra.mxu0 0
        %376 = vmatprep.subr.bf16.mxu0 0
        %377 = vmatpush1.bf16.msra.mxu0 0
        %378 = vmatprep.mubr.bf16.mxu0 0
        %379 = vmatmul.mubr.bf16.gmra.mrb[0].mxu0 %v335
        %v380 = vpop.f32.mrb[0].mxu0
        %v381 = vadd.f32 0.0, %v380
        %v382 = vpop.f32.mrb[0].mxu0
        %v383 = vpop.f32.mrb[0].mxu0
        %v384 = vadd.f32 0.0, %v383
        %v385 = vpop.f32.mrb[0].mxu0
        %386 = vmatprep.mubr.bf16.mxu0 0
        %387 = vmatmul.mubr.bf16.gmra.mrb[0].mxu0 %v338
        %v388 = vpop.f32.mrb[0].mxu0
        %v389 = vadd.f32 0.0, %v388
        %v390 = vpop.f32.mrb[0].mxu0
        %v391 = vpop.f32.mrb[0].mxu0
        %v392 = vadd.f32 0.0, %v391
        %v393 = vpop.f32.mrb[0].mxu0
        %394 = vmatprep.mubr.bf16.mxu0 0
        %395 = vmatmul.mubr.bf16.gmra.mrb[0].mxu0 %v341
        %v396 = vpop.f32.mrb[0].mxu0
        %v397 = vadd.f32 0.0, %v396
        %v398 = vpop.f32.mrb[0].mxu0
        %v399 = vpop.f32.mrb[0].mxu0
        %v400 = vadd.f32 0.0, %v399
        %v401 = vpop.f32.mrb[0].mxu0
        %402 = vmatprep.mubr.bf16.mxu0 0
        %403 = vmatmul.mubr.bf16.gmra.mrb[0].mxu0 %v344
        %v404 = vpop.f32.mrb[0].mxu0
        %v405 = vadd.f32 0.0, %v404
        %v406 = vpop.f32.mrb[0].mxu0
        %v407 = vpop.f32.mrb[0].mxu0
        %v408 = vadd.f32 0.0, %v407
        %v409 = vpop.f32.mrb[0].mxu0
        %410 = vdwg.mxu0
        %v412 = vsel %vm333, %v299, 0
        %v415 = vsel %vm333, %v300, 0
        %v418 = vsel %vm333, %v301, 0
        %v421 = vsel %vm333, %v302, 0
        %423 = vmatprep.subr.bf16.mxu0 0
        %424 = vmatpush1.bf16.msra.mxu0 %v331
        %425 = vmatprep.subr.bf16.mxu0 0
        %426 = vmatpush1.bf16.msra.mxu0 0
        %427 = vmatprep.subr.bf16.mxu0 0
        %428 = vmatpush1.bf16.msra.mxu0 0
        %429 = vmatprep.subr.bf16.mxu0 0
        %430 = vmatpush1.bf16.msra.mxu0 0
        %431 = vmatprep.subr.bf16.mxu0 0
        %432 = vmatpush1.bf16.msra.mxu0 0
        %433 = vmatprep.subr.bf16.mxu0 0
        %434 = vmatpush1.bf16.msra.mxu0 0
        %435 = vmatprep.subr.bf16.mxu0 0
        %436 = vmatpush1.bf16.msra.mxu0 0
        %437 = vmatprep.subr.bf16.mxu0 0
        %438 = vmatpush1.bf16.msra.mxu0 0
        %439 = vmatprep.subr.bf16.mxu0 0
        %440 = vmatpush1.bf16.msra.mxu0 0
        %441 = vmatprep.subr.bf16.mxu0 0
        %442 = vmatpush1.bf16.msra.mxu0 0
        %443 = vmatprep.subr.bf16.mxu0 0
        %444 = vmatpush1.bf16.msra.mxu0 0
        %445 = vmatprep.subr.bf16.mxu0 0
        %446 = vmatpush1.bf16.msra.mxu0 0
        %447 = vmatprep.subr.bf16.mxu0 0
        %448 = vmatpush1.bf16.msra.mxu0 0
        %449 = vmatprep.subr.bf16.mxu0 0
        %450 = vmatpush1.bf16.msra.mxu0 0
        %451 = vmatprep.subr.bf16.mxu0 0
        %452 = vmatpush1.bf16.msra.mxu0 0
        %453 = vmatprep.subr.bf16.mxu0 0
        %454 = vmatpush1.bf16.msra.mxu0 0
        %455 = vmatprep.mubr.bf16.mxu0 0
        %456 = vmatmul.mubr.bf16.gmra.mrb[0].mxu0 %v412
        %v457 = vpop.f32.mrb[0].mxu0
        %v458 = vadd.f32 %v381, %v457
        %v459 = vpop.f32.mrb[0].mxu0
        %v460 = vpop.f32.mrb[0].mxu0
        %v461 = vadd.f32 %v384, %v460
        %v462 = vpop.f32.mrb[0].mxu0
        %463 = vmatprep.mubr.bf16.mxu0 0
        %464 = vmatmul.mubr.bf16.gmra.mrb[0].mxu0 %v415
        %v465 = vpop.f32.mrb[0].mxu0
        %v466 = vadd.f32 %v389, %v465
        %v467 = vpop.f32.mrb[0].mxu0
        %v468 = vpop.f32.mrb[0].mxu0
        %v469 = vadd.f32 %v392, %v468
        %v470 = vpop.f32.mrb[0].mxu0
        %471 = vmatprep.mubr.bf16.mxu0 0
        %472 = vmatmul.mubr.bf16.gmra.mrb[0].mxu0 %v418
        %v473 = vpop.f32.mrb[0].mxu0
        %v474 = vadd.f32 %v397, %v473
        %v475 = vpop.f32.mrb[0].mxu0
        %v476 = vpop.f32.mrb[0].mxu0
        %v477 = vadd.f32 %v400, %v476
        %v478 = vpop.f32.mrb[0].mxu0
        %479 = vmatprep.mubr.bf16.mxu0 0
        %480 = vmatmul.mubr.bf16.gmra.mrb[0].mxu0 %v421
        %v481 = vpop.f32.mrb[0].mxu0
        %v482 = vadd.f32 %v405, %v481
        %v483 = vpop.f32.mrb[0].mxu0
        %v484 = vpop.f32.mrb[0].mxu0
        %v485 = vadd.f32 %v408, %v484
        %v486 = vpop.f32.mrb[0].mxu0
        %487 = vdwg.mxu0
        %v490 = vunpack.c.l.b16 %v325
        %v491 = vunpack.c.l.b16 %v326
        %v492 = vpack.c.b16 %v491, %v490
        %494 = vmatprep.subr.bf16.mxu0 0
        %495 = vmatpush1.bf16.msra.mxu0 %v492
        %496 = vmatprep.subr.bf16.mxu0 0
        %497 = vmatpush1.bf16.msra.mxu0 0
        %498 = vmatprep.subr.bf16.mxu0 0
        %499 = vmatpush1.bf16.msra.mxu0 0
        %500 = vmatprep.subr.bf16.mxu0 0
        %501 = vmatpush1.bf16.msra.mxu0 0
        %502 = vmatprep.subr.bf16.mxu0 0
        %503 = vmatpush1.bf16.msra.mxu0 0
        %504 = vmatprep.subr.bf16.mxu0 0
        %505 = vmatpush1.bf16.msra.mxu0 0
        %506 = vmatprep.subr.bf16.mxu0 0
        %507 = vmatpush1.bf16.msra.mxu0 0
        %508 = vmatprep.subr.bf16.mxu0 0
        %509 = vmatpush1.bf16.msra.mxu0 0
        %510 = vmatprep.subr.bf16.mxu0 0
        %511 = vmatpush1.bf16.msra.mxu0 0
        %512 = vmatprep.subr.bf16.mxu0 0
        %513 = vmatpush1.bf16.msra.mxu0 0
        %514 = vmatprep.subr.bf16.mxu0 0
        %515 = vmatpush1.bf16.msra.mxu0 0
        %516 = vmatprep.subr.bf16.mxu0 0
        %517 = vmatpush1.bf16.msra.mxu0 0
        %518 = vmatprep.subr.bf16.mxu0 0
        %519 = vmatpush1.bf16.msra.mxu0 0
        %520 = vmatprep.subr.bf16.mxu0 0
        %521 = vmatpush1.bf16.msra.mxu0 0
        %522 = vmatprep.subr.bf16.mxu0 0
        %523 = vmatpush1.bf16.msra.mxu0 0
        %524 = vmatprep.subr.bf16.mxu0 0
        %525 = vmatpush1.bf16.msra.mxu0 0
        %526 = vmatprep.mubr.bf16.mxu0 0
        %527 = vmatmul.mubr.bf16.gmra.mrb[0].mxu0 %v412
        %v528 = vpop.f32.mrb[0].mxu0
        %v529 = vadd.f32 0.0, %v528
        %v530 = vpop.f32.mrb[0].mxu0
        %v531 = vpop.f32.mrb[0].mxu0
        %v532 = vadd.f32 0.0, %v531
        %v533 = vpop.f32.mrb[0].mxu0
        %534 = vmatprep.mubr.bf16.mxu0 0
        %535 = vmatmul.mubr.bf16.gmra.mrb[0].mxu0 %v415
        %v536 = vpop.f32.mrb[0].mxu0
        %v537 = vadd.f32 0.0, %v536
        %v538 = vpop.f32.mrb[0].mxu0
        %v539 = vpop.f32.mrb[0].mxu0
        %v540 = vadd.f32 0.0, %v539
        %v541 = vpop.f32.mrb[0].mxu0
        %542 = vmatprep.mubr.bf16.mxu0 0
        %543 = vmatmul.mubr.bf16.gmra.mrb[0].mxu0 %v418
        %v544 = vpop.f32.mrb[0].mxu0
        %v545 = vadd.f32 0.0, %v544
        %v546 = vpop.f32.mrb[0].mxu0
        %v547 = vpop.f32.mrb[0].mxu0
        %v548 = vadd.f32 0.0, %v547
        %v549 = vpop.f32.mrb[0].mxu0
        %550 = vmatprep.mubr.bf16.mxu0 0
        %551 = vmatmul.mubr.bf16.gmra.mrb[0].mxu0 %v421
        %v552 = vpop.f32.mrb[0].mxu0
        %v553 = vadd.f32 0.0, %v552
        %v554 = vpop.f32.mrb[0].mxu0
        %v555 = vpop.f32.mrb[0].mxu0
        %v556 = vadd.f32 0.0, %v555
        %v557 = vpop.f32.mrb[0].mxu0
        %558 = vdwg.mxu0
        %v559 = vadd.f32 %v458, %v529
        %v560 = vadd.f32 %v461, %v532
        %v561 = vadd.f32 %v466, %v537
        %v562 = vadd.f32 %v469, %v540
        %v563 = vadd.f32 %v474, %v545
        %v564 = vadd.f32 %v477, %v548
        %v565 = vadd.f32 %v482, %v553
        %v566 = vadd.f32 %v485, %v556
        %v567 = vpack.c.bf16 %v560, %v559
        %v568 = vpack.c.bf16 %v562, %v561
        %v569 = vpack.c.bf16 %v564, %v563
        %v570 = vpack.c.bf16 %v566, %v565
        %v571 = vld [vmem:[#allocation7] sm:$0xf]
        %v572 = vld [vmem:[#allocation7 + $0x4] sm:$0xf]
        %v573 = vunpack.c.l.bf16 %v567
        %v574 = vunpack.c.h.bf16 %v567
        %v575 = vunpack.c.l.bf16 %v568
        %v576 = vunpack.c.h.bf16 %v568
        %v577 = vunpack.c.l.bf16 %v569
        %v578 = vunpack.c.h.bf16 %v569
        %v579 = vunpack.c.l.bf16 %v570
        %v580 = vunpack.c.h.bf16 %v570
        %v581 = vsub.f32 %v559, %v573
        %v582 = vsub.f32 %v560, %v574
        %v583 = vsub.f32 %v561, %v575
        %v584 = vsub.f32 %v562, %v576
        %v585 = vsub.f32 %v563, %v577
        %v586 = vsub.f32 %v564, %v578
        %v587 = vsub.f32 %v565, %v579
        %v588 = vsub.f32 %v566, %v580
        %v589 = vpack.c.bf16 %v582, %v581
        %v590 = vpack.c.bf16 %v584, %v583
        %v591 = vpack.c.bf16 %v586, %v585
        %v592 = vpack.c.bf16 %v588, %v587
        %v593 = vld [vmem:[%s3] sm:$0xf]
        %v594 = vld [vmem:[%s3 + $0x4] sm:$0xf]
        %v597 = vunpack.c.l.b16 %v571
        %v598 = vunpack.c.l.b16 %v572
        %v599 = vpack.c.b16 %v598, %v597
        %v601 = vsel %vm333, %v599, 0
        %603 = vmatprep.subr.bf16.mxu0 0
        %604 = vmatpush1.bf16.msra.mxu0 %v589
        %605 = vmatprep.subr.bf16.mxu0 0
        %606 = vmatpush1.bf16.msra.mxu0 0
        %607 = vmatprep.subr.bf16.mxu0 0
        %608 = vmatpush1.bf16.msra.mxu0 0
        %609 = vmatprep.subr.bf16.mxu0 0
        %610 = vmatpush1.bf16.msra.mxu0 0
        %611 = vmatprep.subr.bf16.mxu0 0
        %612 = vmatpush1.bf16.msra.mxu0 0
        %613 = vmatprep.subr.bf16.mxu0 0
        %614 = vmatpush1.bf16.msra.mxu0 0
        %615 = vmatprep.subr.bf16.mxu0 0
        %616 = vmatpush1.bf16.msra.mxu0 0
        %617 = vmatprep.subr.bf16.mxu0 0
        %618 = vmatpush1.bf16.msra.mxu0 0
        %619 = vmatprep.subr.bf16.mxu0 0
        %620 = vmatpush1.bf16.msra.mxu0 0
        %621 = vmatprep.subr.bf16.mxu0 0
        %622 = vmatpush1.bf16.msra.mxu0 0
        %623 = vmatprep.subr.bf16.mxu0 0
        %624 = vmatpush1.bf16.msra.mxu0 0
        %625 = vmatprep.subr.bf16.mxu0 0
        %626 = vmatpush1.bf16.msra.mxu0 0
        %627 = vmatprep.subr.bf16.mxu0 0
        %628 = vmatpush1.bf16.msra.mxu0 0
        %629 = vmatprep.subr.bf16.mxu0 0
        %630 = vmatpush1.bf16.msra.mxu0 0
        %631 = vmatprep.subr.bf16.mxu0 0
        %632 = vmatpush1.bf16.msra.mxu0 0
        %633 = vmatprep.subr.bf16.mxu0 0
        %634 = vmatpush1.bf16.msra.mxu0 0
        %635 = vmatprep.mubr.bf16.mxu0 0
        %636 = vmatmul.mubr.bf16.gmra.mrb[0].mxu0 %v601
        %v637 = vpop.f32.mrb[0].mxu0
        %v638 = vadd.f32 0.0, %v637
        %v639 = vpop.f32.mrb[0].mxu0
        %v640 = vpop.f32.mrb[0].mxu0
        %v641 = vadd.f32 0.0, %v640
        %v642 = vpop.f32.mrb[0].mxu0
        %643 = vdwg.mxu0
        %644 = vmatprep.subr.bf16.mxu0 0
        %645 = vmatpush1.bf16.msra.mxu0 %v590
        %646 = vmatprep.subr.bf16.mxu0 0
        %647 = vmatpush1.bf16.msra.mxu0 0
        %648 = vmatprep.subr.bf16.mxu0 0
        %649 = vmatpush1.bf16.msra.mxu0 0
        %650 = vmatprep.subr.bf16.mxu0 0
        %651 = vmatpush1.bf16.msra.mxu0 0
        %652 = vmatprep.subr.bf16.mxu0 0
        %653 = vmatpush1.bf16.msra.mxu0 0
        %654 = vmatprep.subr.bf16.mxu0 0
        %655 = vmatpush1.bf16.msra.mxu0 0
        %656 = vmatprep.subr.bf16.mxu0 0
        %657 = vmatpush1.bf16.msra.mxu0 0
        %658 = vmatprep.subr.bf16.mxu0 0
        %659 = vmatpush1.bf16.msra.mxu0 0
        %660 = vmatprep.subr.bf16.mxu0 0
        %661 = vmatpush1.bf16.msra.mxu0 0
        %662 = vmatprep.subr.bf16.mxu0 0
        %663 = vmatpush1.bf16.msra.mxu0 0
        %664 = vmatprep.subr.bf16.mxu0 0
        %665 = vmatpush1.bf16.msra.mxu0 0
        %666 = vmatprep.subr.bf16.mxu0 0
        %667 = vmatpush1.bf16.msra.mxu0 0
        %668 = vmatprep.subr.bf16.mxu0 0
        %669 = vmatpush1.bf16.msra.mxu0 0
        %670 = vmatprep.subr.bf16.mxu0 0
        %671 = vmatpush1.bf16.msra.mxu0 0
        %672 = vmatprep.subr.bf16.mxu0 0
        %673 = vmatpush1.bf16.msra.mxu0 0
        %674 = vmatprep.subr.bf16.mxu0 0
        %675 = vmatpush1.bf16.msra.mxu0 0
        %676 = vmatprep.mubr.bf16.mxu0 0
        %677 = vmatmul.mubr.bf16.gmra.mrb[0].mxu0 %v601
        %v678 = vpop.f32.mrb[0].mxu0
        %v679 = vadd.f32 0.0, %v678
        %v680 = vpop.f32.mrb[0].mxu0
        %v681 = vpop.f32.mrb[0].mxu0
        %v682 = vadd.f32 0.0, %v681
        %v683 = vpop.f32.mrb[0].mxu0
        %684 = vdwg.mxu0
        %685 = vmatprep.subr.bf16.mxu0 0
        %686 = vmatpush1.bf16.msra.mxu0 %v591
        %687 = vmatprep.subr.bf16.mxu0 0
        %688 = vmatpush1.bf16.msra.mxu0 0
        %689 = vmatprep.subr.bf16.mxu0 0
        %690 = vmatpush1.bf16.msra.mxu0 0
        %691 = vmatprep.subr.bf16.mxu0 0
        %692 = vmatpush1.bf16.msra.mxu0 0
        %693 = vmatprep.subr.bf16.mxu0 0
        %694 = vmatpush1.bf16.msra.mxu0 0
        %695 = vmatprep.subr.bf16.mxu0 0
        %696 = vmatpush1.bf16.msra.mxu0 0
        %697 = vmatprep.subr.bf16.mxu0 0
        %698 = vmatpush1.bf16.msra.mxu0 0
        %699 = vmatprep.subr.bf16.mxu0 0
        %700 = vmatpush1.bf16.msra.mxu0 0
        %701 = vmatprep.subr.bf16.mxu0 0
        %702 = vmatpush1.bf16.msra.mxu0 0
        %703 = vmatprep.subr.bf16.mxu0 0
        %704 = vmatpush1.bf16.msra.mxu0 0
        %705 = vmatprep.subr.bf16.mxu0 0
        %706 = vmatpush1.bf16.msra.mxu0 0
        %707 = vmatprep.subr.bf16.mxu0 0
        %708 = vmatpush1.bf16.msra.mxu0 0
        %709 = vmatprep.subr.bf16.mxu0 0
        %710 = vmatpush1.bf16.msra.mxu0 0
        %711 = vmatprep.subr.bf16.mxu0 0
        %712 = vmatpush1.bf16.msra.mxu0 0
        %713 = vmatprep.subr.bf16.mxu0 0
        %714 = vmatpush1.bf16.msra.mxu0 0
        %715 = vmatprep.subr.bf16.mxu0 0
        %716 = vmatpush1.bf16.msra.mxu0 0
        %717 = vmatprep.mubr.bf16.mxu0 0
        %718 = vmatmul.mubr.bf16.gmra.mrb[0].mxu0 %v601
        %v719 = vpop.f32.mrb[0].mxu0
        %v720 = vadd.f32 0.0, %v719
        %v721 = vpop.f32.mrb[0].mxu0
        %v722 = vpop.f32.mrb[0].mxu0
        %v723 = vadd.f32 0.0, %v722
        %v724 = vpop.f32.mrb[0].mxu0
        %725 = vdwg.mxu0
        %726 = vmatprep.subr.bf16.mxu0 0
        %727 = vmatpush1.bf16.msra.mxu0 %v592
        %728 = vmatprep.subr.bf16.mxu0 0
        %729 = vmatpush1.bf16.msra.mxu0 0
        %730 = vmatprep.subr.bf16.mxu0 0
        %731 = vmatpush1.bf16.msra.mxu0 0
        %732 = vmatprep.subr.bf16.mxu0 0
        %733 = vmatpush1.bf16.msra.mxu0 0
        %734 = vmatprep.subr.bf16.mxu0 0
        %735 = vmatpush1.bf16.msra.mxu0 0
        %736 = vmatprep.subr.bf16.mxu0 0
        %737 = vmatpush1.bf16.msra.mxu0 0
        %738 = vmatprep.subr.bf16.mxu0 0
        %739 = vmatpush1.bf16.msra.mxu0 0
        %740 = vmatprep.subr.bf16.mxu0 0
        %741 = vmatpush1.bf16.msra.mxu0 0
        %742 = vmatprep.subr.bf16.mxu0 0
        %743 = vmatpush1.bf16.msra.mxu0 0
        %744 = vmatprep.subr.bf16.mxu0 0
        %745 = vmatpush1.bf16.msra.mxu0 0
        %746 = vmatprep.subr.bf16.mxu0 0
        %747 = vmatpush1.bf16.msra.mxu0 0
        %748 = vmatprep.subr.bf16.mxu0 0
        %749 = vmatpush1.bf16.msra.mxu0 0
        %750 = vmatprep.subr.bf16.mxu0 0
        %751 = vmatpush1.bf16.msra.mxu0 0
        %752 = vmatprep.subr.bf16.mxu0 0
        %753 = vmatpush1.bf16.msra.mxu0 0
        %754 = vmatprep.subr.bf16.mxu0 0
        %755 = vmatpush1.bf16.msra.mxu0 0
        %756 = vmatprep.subr.bf16.mxu0 0
        %757 = vmatpush1.bf16.msra.mxu0 0
        %758 = vmatprep.mubr.bf16.mxu0 0
        %759 = vmatmul.mubr.bf16.gmra.mrb[0].mxu0 %v601
        %v760 = vpop.f32.mrb[0].mxu0
        %v761 = vadd.f32 0.0, %v760
        %v762 = vpop.f32.mrb[0].mxu0
        %v763 = vpop.f32.mrb[0].mxu0
        %v764 = vadd.f32 0.0, %v763
        %v765 = vpop.f32.mrb[0].mxu0
        %766 = vdwg.mxu0
        %767 = vmatprep.subr.bf16.mxu0 0
        %768 = vmatpush1.bf16.msra.mxu0 %v567
        %769 = vmatprep.subr.bf16.mxu0 0
        %770 = vmatpush1.bf16.msra.mxu0 0
        %771 = vmatprep.subr.bf16.mxu0 0
        %772 = vmatpush1.bf16.msra.mxu0 0
        %773 = vmatprep.subr.bf16.mxu0 0
        %774 = vmatpush1.bf16.msra.mxu0 0
        %775 = vmatprep.subr.bf16.mxu0 0
        %776 = vmatpush1.bf16.msra.mxu0 0
        %777 = vmatprep.subr.bf16.mxu0 0
        %778 = vmatpush1.bf16.msra.mxu0 0
        %779 = vmatprep.subr.bf16.mxu0 0
        %780 = vmatpush1.bf16.msra.mxu0 0
        %781 = vmatprep.subr.bf16.mxu0 0
        %782 = vmatpush1.bf16.msra.mxu0 0
        %783 = vmatprep.subr.bf16.mxu0 0
        %784 = vmatpush1.bf16.msra.mxu0 0
        %785 = vmatprep.subr.bf16.mxu0 0
        %786 = vmatpush1.bf16.msra.mxu0 0
        %787 = vmatprep.subr.bf16.mxu0 0
        %788 = vmatpush1.bf16.msra.mxu0 0
        %789 = vmatprep.subr.bf16.mxu0 0
        %790 = vmatpush1.bf16.msra.mxu0 0
        %791 = vmatprep.subr.bf16.mxu0 0
        %792 = vmatpush1.bf16.msra.mxu0 0
        %793 = vmatprep.subr.bf16.mxu0 0
        %794 = vmatpush1.bf16.msra.mxu0 0
        %795 = vmatprep.subr.bf16.mxu0 0
        %796 = vmatpush1.bf16.msra.mxu0 0
        %797 = vmatprep.subr.bf16.mxu0 0
        %798 = vmatpush1.bf16.msra.mxu0 0
        %799 = vmatprep.mubr.bf16.mxu0 0
        %800 = vmatmul.mubr.bf16.gmra.mrb[0].mxu0 %v601
        %v801 = vpop.f32.mrb[0].mxu0
        %v802 = vadd.f32 %v638, %v801
        %v803 = vpop.f32.mrb[0].mxu0
        %v804 = vpop.f32.mrb[0].mxu0
        %v805 = vadd.f32 %v641, %v804
        %v806 = vpop.f32.mrb[0].mxu0
        %807 = vdwg.mxu0
        %808 = vmatprep.subr.bf16.mxu0 0
        %809 = vmatpush1.bf16.msra.mxu0 %v568
        %810 = vmatprep.subr.bf16.mxu0 0
        %811 = vmatpush1.bf16.msra.mxu0 0
        %812 = vmatprep.subr.bf16.mxu0 0
        %813 = vmatpush1.bf16.msra.mxu0 0
        %814 = vmatprep.subr.bf16.mxu0 0
        %815 = vmatpush1.bf16.msra.mxu0 0
        %816 = vmatprep.subr.bf16.mxu0 0
        %817 = vmatpush1.bf16.msra.mxu0 0
        %818 = vmatprep.subr.bf16.mxu0 0
        %819 = vmatpush1.bf16.msra.mxu0 0
        %820 = vmatprep.subr.bf16.mxu0 0
        %821 = vmatpush1.bf16.msra.mxu0 0
        %822 = vmatprep.subr.bf16.mxu0 0
        %823 = vmatpush1.bf16.msra.mxu0 0
        %824 = vmatprep.subr.bf16.mxu0 0
        %825 = vmatpush1.bf16.msra.mxu0 0
        %826 = vmatprep.subr.bf16.mxu0 0
        %827 = vmatpush1.bf16.msra.mxu0 0
        %828 = vmatprep.subr.bf16.mxu0 0
        %829 = vmatpush1.bf16.msra.mxu0 0
        %830 = vmatprep.subr.bf16.mxu0 0
        %831 = vmatpush1.bf16.msra.mxu0 0
        %832 = vmatprep.subr.bf16.mxu0 0
        %833 = vmatpush1.bf16.msra.mxu0 0
        %834 = vmatprep.subr.bf16.mxu0 0
        %835 = vmatpush1.bf16.msra.mxu0 0
        %836 = vmatprep.subr.bf16.mxu0 0
        %837 = vmatpush1.bf16.msra.mxu0 0
        %838 = vmatprep.subr.bf16.mxu0 0
        %839 = vmatpush1.bf16.msra.mxu0 0
        %840 = vmatprep.mubr.bf16.mxu0 0
        %841 = vmatmul.mubr.bf16.gmra.mrb[0].mxu0 %v601
        %v842 = vpop.f32.mrb[0].mxu0
        %v843 = vadd.f32 %v679, %v842
        %v844 = vpop.f32.mrb[0].mxu0
        %v845 = vpop.f32.mrb[0].mxu0
        %v846 = vadd.f32 %v682, %v845
        %v847 = vpop.f32.mrb[0].mxu0
        %848 = vdwg.mxu0
        %849 = vmatprep.subr.bf16.mxu0 0
        %850 = vmatpush1.bf16.msra.mxu0 %v569
        %851 = vmatprep.subr.bf16.mxu0 0
        %852 = vmatpush1.bf16.msra.mxu0 0
        %853 = vmatprep.subr.bf16.mxu0 0
        %854 = vmatpush1.bf16.msra.mxu0 0
        %855 = vmatprep.subr.bf16.mxu0 0
        %856 = vmatpush1.bf16.msra.mxu0 0
        %857 = vmatprep.subr.bf16.mxu0 0
        %858 = vmatpush1.bf16.msra.mxu0 0
        %859 = vmatprep.subr.bf16.mxu0 0
        %860 = vmatpush1.bf16.msra.mxu0 0
        %861 = vmatprep.subr.bf16.mxu0 0
        %862 = vmatpush1.bf16.msra.mxu0 0
        %863 = vmatprep.subr.bf16.mxu0 0
        %864 = vmatpush1.bf16.msra.mxu0 0
        %865 = vmatprep.subr.bf16.mxu0 0
        %866 = vmatpush1.bf16.msra.mxu0 0
        %867 = vmatprep.subr.bf16.mxu0 0
        %868 = vmatpush1.bf16.msra.mxu0 0
        %869 = vmatprep.subr.bf16.mxu0 0
        %870 = vmatpush1.bf16.msra.mxu0 0
        %871 = vmatprep.subr.bf16.mxu0 0
        %872 = vmatpush1.bf16.msra.mxu0 0
        %873 = vmatprep.subr.bf16.mxu0 0
        %874 = vmatpush1.bf16.msra.mxu0 0
        %875 = vmatprep.subr.bf16.mxu0 0
        %876 = vmatpush1.bf16.msra.mxu0 0
        %877 = vmatprep.subr.bf16.mxu0 0
        %878 = vmatpush1.bf16.msra.mxu0 0
        %879 = vmatprep.subr.bf16.mxu0 0
        %880 = vmatpush1.bf16.msra.mxu0 0
        %881 = vmatprep.mubr.bf16.mxu0 0
        %882 = vmatmul.mubr.bf16.gmra.mrb[0].mxu0 %v601
        %v883 = vpop.f32.mrb[0].mxu0
        %v884 = vadd.f32 %v720, %v883
        %v885 = vpop.f32.mrb[0].mxu0
        %v886 = vpop.f32.mrb[0].mxu0
        %v887 = vadd.f32 %v723, %v886
        %v888 = vpop.f32.mrb[0].mxu0
        %889 = vdwg.mxu0
        %890 = vmatprep.subr.bf16.mxu0 0
        %891 = vmatpush1.bf16.msra.mxu0 %v570
        %892 = vmatprep.subr.bf16.mxu0 0
        %893 = vmatpush1.bf16.msra.mxu0 0
        %894 = vmatprep.subr.bf16.mxu0 0
        %895 = vmatpush1.bf16.msra.mxu0 0
        %896 = vmatprep.subr.bf16.mxu0 0
        %897 = vmatpush1.bf16.msra.mxu0 0
        %898 = vmatprep.subr.bf16.mxu0 0
        %899 = vmatpush1.bf16.msra.mxu0 0
        %900 = vmatprep.subr.bf16.mxu0 0
        %901 = vmatpush1.bf16.msra.mxu0 0
        %902 = vmatprep.subr.bf16.mxu0 0
        %903 = vmatpush1.bf16.msra.mxu0 0
        %904 = vmatprep.subr.bf16.mxu0 0
        %905 = vmatpush1.bf16.msra.mxu0 0
        %906 = vmatprep.subr.bf16.mxu0 0
        %907 = vmatpush1.bf16.msra.mxu0 0
        %908 = vmatprep.subr.bf16.mxu0 0
        %909 = vmatpush1.bf16.msra.mxu0 0
        %910 = vmatprep.subr.bf16.mxu0 0
        %911 = vmatpush1.bf16.msra.mxu0 0
        %912 = vmatprep.subr.bf16.mxu0 0
        %913 = vmatpush1.bf16.msra.mxu0 0
        %914 = vmatprep.subr.bf16.mxu0 0
        %915 = vmatpush1.bf16.msra.mxu0 0
        %916 = vmatprep.subr.bf16.mxu0 0
        %917 = vmatpush1.bf16.msra.mxu0 0
        %918 = vmatprep.subr.bf16.mxu0 0
        %919 = vmatpush1.bf16.msra.mxu0 0
        %920 = vmatprep.subr.bf16.mxu0 0
        %921 = vmatpush1.bf16.msra.mxu0 0
        %922 = vmatprep.mubr.bf16.mxu0 0
        %923 = vmatmul.mubr.bf16.gmra.mrb[0].mxu0 %v601
        %v924 = vpop.f32.mrb[0].mxu0
        %v925 = vadd.f32 %v761, %v924
        %v926 = vpop.f32.mrb[0].mxu0
        %v927 = vpop.f32.mrb[0].mxu0
        %v928 = vadd.f32 %v764, %v927
        %v929 = vpop.f32.mrb[0].mxu0
        %930 = vdwg.mxu0
        %v933 = vunpack.c.l.b16 %v593
        %v934 = vunpack.c.l.b16 %v594
        %v935 = vpack.c.b16 %v934, %v933
        %v937 = vsel %vm333, %v935, 0
        %939 = vmatprep.subr.bf16.mxu0 0
        %940 = vmatpush1.bf16.msra.mxu0 %v567
        %941 = vmatprep.subr.bf16.mxu0 0
        %942 = vmatpush1.bf16.msra.mxu0 0
        %943 = vmatprep.subr.bf16.mxu0 0
        %944 = vmatpush1.bf16.msra.mxu0 0
        %945 = vmatprep.subr.bf16.mxu0 0
        %946 = vmatpush1.bf16.msra.mxu0 0
        %947 = vmatprep.subr.bf16.mxu0 0
        %948 = vmatpush1.bf16.msra.mxu0 0
        %949 = vmatprep.subr.bf16.mxu0 0
        %950 = vmatpush1.bf16.msra.mxu0 0
        %951 = vmatprep.subr.bf16.mxu0 0
        %952 = vmatpush1.bf16.msra.mxu0 0
        %953 = vmatprep.subr.bf16.mxu0 0
        %954 = vmatpush1.bf16.msra.mxu0 0
        %955 = vmatprep.subr.bf16.mxu0 0
        %956 = vmatpush1.bf16.msra.mxu0 0
        %957 = vmatprep.subr.bf16.mxu0 0
        %958 = vmatpush1.bf16.msra.mxu0 0
        %959 = vmatprep.subr.bf16.mxu0 0
        %960 = vmatpush1.bf16.msra.mxu0 0
        %961 = vmatprep.subr.bf16.mxu0 0
        %962 = vmatpush1.bf16.msra.mxu0 0
        %963 = vmatprep.subr.bf16.mxu0 0
        %964 = vmatpush1.bf16.msra.mxu0 0
        %965 = vmatprep.subr.bf16.mxu0 0
        %966 = vmatpush1.bf16.msra.mxu0 0
        %967 = vmatprep.subr.bf16.mxu0 0
        %968 = vmatpush1.bf16.msra.mxu0 0
        %969 = vmatprep.subr.bf16.mxu0 0
        %970 = vmatpush1.bf16.msra.mxu0 0
        %971 = vmatprep.mubr.bf16.mxu0 0
        %972 = vmatmul.mubr.bf16.gmra.mrb[0].mxu0 %v937
        %v973 = vpop.f32.mrb[0].mxu0
        %v974 = vadd.f32 0.0, %v973
        %v975 = vpop.f32.mrb[0].mxu0
        %v976 = vpop.f32.mrb[0].mxu0
        %v977 = vadd.f32 0.0, %v976
        %v978 = vpop.f32.mrb[0].mxu0
        %979 = vdwg.mxu0
        %980 = vmatprep.subr.bf16.mxu0 0
        %981 = vmatpush1.bf16.msra.mxu0 %v568
        %982 = vmatprep.subr.bf16.mxu0 0
        %983 = vmatpush1.bf16.msra.mxu0 0
        %984 = vmatprep.subr.bf16.mxu0 0
        %985 = vmatpush1.bf16.msra.mxu0 0
        %986 = vmatprep.subr.bf16.mxu0 0
        %987 = vmatpush1.bf16.msra.mxu0 0
        %988 = vmatprep.subr.bf16.mxu0 0
        %989 = vmatpush1.bf16.msra.mxu0 0
        %990 = vmatprep.subr.bf16.mxu0 0
        %991 = vmatpush1.bf16.msra.mxu0 0
        %992 = vmatprep.subr.bf16.mxu0 0
        %993 = vmatpush1.bf16.msra.mxu0 0
        %994 = vmatprep.subr.bf16.mxu0 0
        %995 = vmatpush1.bf16.msra.mxu0 0
        %996 = vmatprep.subr.bf16.mxu0 0
        %997 = vmatpush1.bf16.msra.mxu0 0
        %998 = vmatprep.subr.bf16.mxu0 0
        %999 = vmatpush1.bf16.msra.mxu0 0
        %1000 = vmatprep.subr.bf16.mxu0 0
        %1001 = vmatpush1.bf16.msra.mxu0 0
        %1002 = vmatprep.subr.bf16.mxu0 0
        %1003 = vmatpush1.bf16.msra.mxu0 0
        %1004 = vmatprep.subr.bf16.mxu0 0
        %1005 = vmatpush1.bf16.msra.mxu0 0
        %1006 = vmatprep.subr.bf16.mxu0 0
        %1007 = vmatpush1.bf16.msra.mxu0 0
        %1008 = vmatprep.subr.bf16.mxu0 0
        %1009 = vmatpush1.bf16.msra.mxu0 0
        %1010 = vmatprep.subr.bf16.mxu0 0
        %1011 = vmatpush1.bf16.msra.mxu0 0
        %1012 = vmatprep.mubr.bf16.mxu0 0
        %1013 = vmatmul.mubr.bf16.gmra.mrb[0].mxu0 %v937
        %v1014 = vpop.f32.mrb[0].mxu0
        %v1015 = vadd.f32 0.0, %v1014
        %v1016 = vpop.f32.mrb[0].mxu0
        %v1017 = vpop.f32.mrb[0].mxu0
        %v1018 = vadd.f32 0.0, %v1017
        %v1019 = vpop.f32.mrb[0].mxu0
        %1020 = vdwg.mxu0
        %1021 = vmatprep.subr.bf16.mxu0 0
        %1022 = vmatpush1.bf16.msra.mxu0 %v569
        %1023 = vmatprep.subr.bf16.mxu0 0
        %1024 = vmatpush1.bf16.msra.mxu0 0
        %1025 = vmatprep.subr.bf16.mxu0 0
        %1026 = vmatpush1.bf16.msra.mxu0 0
        %1027 = vmatprep.subr.bf16.mxu0 0
        %1028 = vmatpush1.bf16.msra.mxu0 0
        %1029 = vmatprep.subr.bf16.mxu0 0
        %1030 = vmatpush1.bf16.msra.mxu0 0
        %1031 = vmatprep.subr.bf16.mxu0 0
        %1032 = vmatpush1.bf16.msra.mxu0 0
        %1033 = vmatprep.subr.bf16.mxu0 0
        %1034 = vmatpush1.bf16.msra.mxu0 0
        %1035 = vmatprep.subr.bf16.mxu0 0
        %1036 = vmatpush1.bf16.msra.mxu0 0
        %1037 = vmatprep.subr.bf16.mxu0 0
        %1038 = vmatpush1.bf16.msra.mxu0 0
        %1039 = vmatprep.subr.bf16.mxu0 0
        %1040 = vmatpush1.bf16.msra.mxu0 0
        %1041 = vmatprep.subr.bf16.mxu0 0
        %1042 = vmatpush1.bf16.msra.mxu0 0
        %1043 = vmatprep.subr.bf16.mxu0 0
        %1044 = vmatpush1.bf16.msra.mxu0 0
        %1045 = vmatprep.subr.bf16.mxu0 0
        %1046 = vmatpush1.bf16.msra.mxu0 0
        %1047 = vmatprep.subr.bf16.mxu0 0
        %1048 = vmatpush1.bf16.msra.mxu0 0
        %1049 = vmatprep.subr.bf16.mxu0 0
        %1050 = vmatpush1.bf16.msra.mxu0 0
        %1051 = vmatprep.subr.bf16.mxu0 0
        %1052 = vmatpush1.bf16.msra.mxu0 0
        %1053 = vmatprep.mubr.bf16.mxu0 0
        %1054 = vmatmul.mubr.bf16.gmra.mrb[0].mxu0 %v937
        %v1055 = vpop.f32.mrb[0].mxu0
        %v1056 = vadd.f32 0.0, %v1055
        %v1057 = vpop.f32.mrb[0].mxu0
        %v1058 = vpop.f32.mrb[0].mxu0
        %v1059 = vadd.f32 0.0, %v1058
        %v1060 = vpop.f32.mrb[0].mxu0
        %1061 = vdwg.mxu0
        %1062 = vmatprep.subr.bf16.mxu0 0
        %1063 = vmatpush1.bf16.msra.mxu0 %v570
        %1064 = vmatprep.subr.bf16.mxu0 0
        %1065 = vmatpush1.bf16.msra.mxu0 0
        %1066 = vmatprep.subr.bf16.mxu0 0
        %1067 = vmatpush1.bf16.msra.mxu0 0
        %1068 = vmatprep.subr.bf16.mxu0 0
        %1069 = vmatpush1.bf16.msra.mxu0 0
        %1070 = vmatprep.subr.bf16.mxu0 0
        %1071 = vmatpush1.bf16.msra.mxu0 0
        %1072 = vmatprep.subr.bf16.mxu0 0
        %1073 = vmatpush1.bf16.msra.mxu0 0
        %1074 = vmatprep.subr.bf16.mxu0 0
        %1075 = vmatpush1.bf16.msra.mxu0 0
        %1076 = vmatprep.subr.bf16.mxu0 0
        %1077 = vmatpush1.bf16.msra.mxu0 0
        %1078 = vmatprep.subr.bf16.mxu0 0
        %1079 = vmatpush1.bf16.msra.mxu0 0
        %1080 = vmatprep.subr.bf16.mxu0 0
        %1081 = vmatpush1.bf16.msra.mxu0 0
        %1082 = vmatprep.subr.bf16.mxu0 0
        %1083 = vmatpush1.bf16.msra.mxu0 0
        %1084 = vmatprep.subr.bf16.mxu0 0
        %1085 = vmatpush1.bf16.msra.mxu0 0
        %1086 = vmatprep.subr.bf16.mxu0 0
        %1087 = vmatpush1.bf16.msra.mxu0 0
        %1088 = vmatprep.subr.bf16.mxu0 0
        %1089 = vmatpush1.bf16.msra.mxu0 0
        %1090 = vmatprep.subr.bf16.mxu0 0
        %1091 = vmatpush1.bf16.msra.mxu0 0
        %1092 = vmatprep.subr.bf16.mxu0 0
        %1093 = vmatpush1.bf16.msra.mxu0 0
        %1094 = vmatprep.mubr.bf16.mxu0 0
        %1095 = vmatmul.mubr.bf16.gmra.mrb[0].mxu0 %v937
        %v1096 = vpop.f32.mrb[0].mxu0
        %v1097 = vadd.f32 0.0, %v1096
        %v1098 = vpop.f32.mrb[0].mxu0
        %v1099 = vpop.f32.mrb[0].mxu0
        %v1100 = vadd.f32 0.0, %v1099
        %v1101 = vpop.f32.mrb[0].mxu0
        %1102 = vdwg.mxu0
        %v1103 = vadd.f32 %v802, %v974
        %v1104 = vadd.f32 %v805, %v977
        %v1105 = vadd.f32 %v843, %v1015
        %v1106 = vadd.f32 %v846, %v1018
        %v1107 = vadd.f32 %v884, %v1056
        %v1108 = vadd.f32 %v887, %v1059
        %v1109 = vadd.f32 %v925, %v1097
        %v1110 = vadd.f32 %v928, %v1100
        %1111 = vst.msk [vmem:[%s287] sm:$0xff] %vm333, %v1103
        %1112 = vst.msk [vmem:[%s287 + $0x8] sm:$0xff] %vm333, %v1104
        %1113 = vst.msk [vmem:[%s287 + $0x10] sm:$0xff] %vm333, %v1105
        %1114 = vst.msk [vmem:[%s287 + $0x18] sm:$0xff] %vm333, %v1106
        %1115 = vst.msk [vmem:[%s287 + $0x20] sm:$0xff] %vm333, %v1107
        %1116 = vst.msk [vmem:[%s287 + $0x28] sm:$0xff] %vm333, %v1108
        %1117 = vst.msk [vmem:[%s287 + $0x30] sm:$0xff] %vm333, %v1109
        %1118 = vst.msk [vmem:[%s287 + $0x38] sm:$0xff] %vm333, %v1110
        %s1119 = sand.u32 %s142, 1
        %s1120 = scalar_lea.sflag [#allocation4], %s1119
        %s1121 = sand.u32 %s142, 1
        %s1122 = smul.addr %s1121, 64
        %s1123 = scalar_lea.vmem [#allocation10], %s1122
        // Predicated region
        $region57: #{tpu_custom_call.1} parent=39 // pred_check
          %p1124 = pneg %p152
        $region58: #{tpu_custom_call.1} parent=39 // pred_check_branch
          %1126 = sbr.rel (%p1124) target = $region60
        $region59: #{tpu_custom_call.1} parent=39 // pred_region
          %s1127 = smul.u32 4, %s24
          %s1129 = ssub.s32 1024, 1024
          %1130 = vsyncadd %s1120, %s1129
          %s1131 = smul.addr %s1127, 2
          %s1132 = smul.addr %s1131, 128
          %s1133 = scalar_lea.hbm %s5, %s1132
          %s1134 = sshll.u32 %s1123, 4
          %s1135 = int_to_ptr.vmem [resolvable:$true] %s1134
          %1140 = dma.vmem_to_hbm [thread:$0]  %s1135, 1024, %s1133, %s1120, 128, 128, 8
        $region60: #{tpu_custom_call.1} parent=39 // pred_fallthru
          _
      $region40: #{tpu_custom_call.1} parent=5 // pred_fallthru
        _
      %p1141 = scmp.le.s32.totalorder 2, %s19
      // Predicated region
      $region61: #{tpu_custom_call.1} parent=5 // pred_check
        %p1142 = pneg %p1141
      $region62: #{tpu_custom_call.1} parent=5 // pred_check_branch
        %1144 = sbr.rel (%p1142) target = $region64
      $region63: #{tpu_custom_call.1} parent=5 // pred_region
        %s1145 = ssub.s32 %s19, 2
        // Predicated region
        $region65: #{tpu_custom_call.1} parent=63 // pred_check
          %p1146 = pneg %p158
        $region66: #{tpu_custom_call.1} parent=63 // pred_check_branch
          %1148 = sbr.rel (%p1146) target = $region68
        $region67: #{tpu_custom_call.1} parent=63 // pred_region
          %s1149 = sand.u32 %s143, 1
          %s1150 = scalar_lea.sflag [#allocation4], %s1149
          %s1151 = sand.u32 %s143, 1
          %s1152 = smul.addr %s1151, 64
          %s1153 = scalar_lea.vmem [#allocation10], %s1152
          %1154 = dma.done %s1150, 1024
        $region68: #{tpu_custom_call.1} parent=63 // pred_fallthru
          _
      $region64: #{tpu_custom_call.1} parent=5 // pred_fallthru
        _
    $region6: #{tpu_custom_call.1} parent=1 // loop_footer
      %s23 = sadd.s32 1, %s19
    $region7: #{tpu_custom_call.1} parent=1 // loop_footer_branch
      %18 = sbr.rel target = $region3
    $region8: #{tpu_custom_call.1} parent=1 // loop_exit
      _
    %1155 = vsyncpa [#allocation3], 1
    %s1156 = scalar_lea.sflag [#allocation3], 1
    %1157 = vsyncpa %s1156, 1
    %1158 = vsyncpa [#allocation6], 1
    %1159 = vsyncpa [#allocation9], 1
    %s1160 = scalar_lea.sflag [#allocation9], 1
    %1161 = vsyncpa %s1160, 1
    %1162 = vsyncpa [#allocation4], 1
    %s1163 = scalar_lea.sflag [#allocation4], 1
    %1164 = vsyncpa %s1163, 1

</llo_original>
